<compile_context>
chip_gen: v7x
topology: tpu7x:2x2x1
jax: 0.10.0
libtpu: 0.0.40
codegen_flags: <defaults>
</compile_context>

<pallas_src>
import jax
import jax.numpy as jnp
from jax import lax
from jax.experimental import pallas as pl
from jax.experimental.pallas import tpu as pltpu


def linear_kernel(x_ref, w_ref, b_ref, o_ref):
    # x_ref: (tile_b, 784) f32   w_ref: (10, 784) f32 (native PyTorch layout)
    # b_ref: (1, 10) f32         o_ref: (tile_b, 10)
    # x @ w.T without materializing a transpose: contract dim 1 of x with
    # dim 1 of w; f32 accumulation on the MXU.
    acc = lax.dot_general(
        x_ref[...], w_ref[...],
        dimension_numbers=(((1,), (1,)), ((), ())),
        preferred_element_type=jnp.float32,
    )                                            # (tile_b, 10) f32
    o_ref[...] = (acc + b_ref[...]).astype(o_ref.dtype)


def _pick_tile_b(B):
    """Choose the batch tile.

    Small B: one whole-batch block (launch/per-step-overhead bound regime).
    Large B: biggest tile first (HBM-roofline amortization), preferring an
    even number of grid steps so v7x's two TensorCores both get work.
    """
    if B <= 256:
        return B
    candidates = (2048, 1024, 512, 256, 128, 64, 32, 16, 8)
    for t in candidates:                       # pass 1: even grid, >= 2 steps
        if B % t == 0 and (B // t) % 2 == 0:
            return t
    for t in candidates:                       # pass 2: any exact divisor
        if B % t == 0:
            return t
    return B                                   # fallback: single full block


def _vmem_limit_bytes(tile_b, F, O, itemsize=4):
    """Explicit scoped-VMEM limit only when the default (16 MiB on v5e) is tight."""
    need = (2 * tile_b * F * itemsize        # double-buffered x tile
            + 2 * tile_b * O * itemsize      # double-buffered out tile
            + O * F * itemsize + O * itemsize)  # resident weight + bias
    need_with_headroom = int(need * 1.5)
    default_v5e = 16 * 1024 * 1024
    if need_with_headroom <= default_v5e:
        return None                           # defaults are fine everywhere
    return min(need_with_headroom, 32 * 1024 * 1024)   # safe on v5e/v6e/v7x


def mnist_logistic_forward(x, weight, bias):
    """x: (B, 784) f32; weight: (10, 784) f32 (PyTorch layout); bias: (10,) f32."""
    B, F = x.shape
    O = weight.shape[0]

    tile_b = _pick_tile_b(B)
    assert B % tile_b == 0, f"tile_b={tile_b} must divide B={B}"
    num_tiles = B // tile_b

    b2d = bias.reshape(1, O)   # 2-D for TPU layout (cheap, lane-dim last)

    return pl.pallas_call(
        linear_kernel,
        out_shape=jax.ShapeDtypeStruct((B, O), x.dtype),
        grid_spec=pl.GridSpec(
            grid=(num_tiles,),
            in_specs=[
                # x: tiled along batch; pipelined while W/b stay resident.
                pl.BlockSpec((tile_b, F), lambda i: (i, 0)),
                # weight: same block every step -> VMEM-resident, DMA'd once.
                pl.BlockSpec((O, F), lambda i: (0, 0)),
                # bias: resident.
                pl.BlockSpec((1, O), lambda i: (0, 0)),
            ],
            out_specs=pl.BlockSpec((tile_b, O), lambda i: (i, 0)),
        ),
        compiler_params=pltpu.CompilerParams(
            dimension_semantics=("parallel",),
            vmem_limit_bytes=_vmem_limit_bytes(tile_b, F, O),
        ),
    )(x, weight, b2d)


if __name__ == "__main__":
    key = jax.random.PRNGKey(0)
    kx, kw, kb = jax.random.split(key, 3)

    bs = 64            # matches the PyTorch script's bs = 64
    in_features = 784
    out_features = 10

    # Deterministic synthetic inputs/parameters (nn.Linear(784, 10) shapes).
    x = jax.random.normal(kx, (bs, in_features), dtype=jnp.float32)
    bound = 1.0 / (in_features ** 0.5)
    weight = jax.random.uniform(kw, (out_features, in_features),
                                minval=-bound, maxval=bound, dtype=jnp.float32)
    bias = jax.random.uniform(kb, (out_features,),
                              minval=-bound, maxval=bound, dtype=jnp.float32)

    out = mnist_logistic_forward(x, weight, bias)
    out = jax.block_until_ready(out)
    assert out.shape == (bs, out_features)

    # Reference: full-f32 PyTorch-equivalent math (kernel now runs in f32 too).
    ref_f32 = x @ weight.T + bias
    assert jnp.allclose(out, ref_f32, atol=1e-3, rtol=1e-3)

    print("KERNEL_OK")
</pallas_src>

<mosaic_0001>
module attributes {stable_mosaic.version = 11 : i64} {
  func.func @linear_kernel(%arg0: i32, %arg1: memref<64x784xf32, #tpu.memory_space<vmem>>, %arg2: memref<10x784xf32, #tpu.memory_space<vmem>>, %arg3: memref<1x10xf32, #tpu.memory_space<vmem>>, %arg4: memref<64x10xf32, #tpu.memory_space<vmem>>) attributes {dimension_semantics = [#tpu.dimension_semantics<parallel>], iteration_bounds = array<i64: 1>, scalar_prefetch = 0 : i64, scratch_operands = 0 : i64, tpu.core_type = #tpu.core_type<tc>, window_params = [{transform_indices = @transform_0, window_bounds = array<i64: 64, 784>}, {pipeline_mode = #tpu.pipeline_mode<synchronous>, transform_indices = @transform_1, window_bounds = array<i64: 10, 784>}, {pipeline_mode = #tpu.pipeline_mode<synchronous>, transform_indices = @transform_2, window_bounds = array<i64: 1, 10>}, {transform_indices = @transform_3, window_bounds = array<i64: 64, 10>}]} {
    %c0 = arith.constant 0 : index
    %c0_0 = arith.constant 0 : index
    %0 = vector.load %arg1[%c0, %c0_0] : memref<64x784xf32, #tpu.memory_space<vmem>>, vector<64x784xf32>
    %c0_1 = arith.constant 0 : index
    %c0_2 = arith.constant 0 : index
    %1 = vector.load %arg2[%c0_1, %c0_2] : memref<10x784xf32, #tpu.memory_space<vmem>>, vector<10x784xf32>
    %cst = arith.constant dense<0.000000e+00> : vector<64x10xf32>
    %2 = tpu.matmul %0, %1, %cst {dimension_numbers = #tpu.dot_dimension_numbers<[1], [1], [0], [0], [0, 0, 1, 0], [], []>} : vector<64x784xf32>, vector<10x784xf32>, vector<64x10xf32> -> vector<64x10xf32>
    %c0_3 = arith.constant 0 : index
    %c0_4 = arith.constant 0 : index
    %3 = vector.load %arg3[%c0_3, %c0_4] : memref<1x10xf32, #tpu.memory_space<vmem>>, vector<1x10xf32>
    %4 = vector.broadcast %3 : vector<1x10xf32> to vector<64x10xf32>
    %5 = arith.addf %2, %4 : vector<64x10xf32>
    %c0_5 = arith.constant 0 : index
    %c0_6 = arith.constant 0 : index
    %6 = vector.load %arg4[%c0_5, %c0_6] : memref<64x10xf32, #tpu.memory_space<vmem>>, vector<64x10xf32>
    tpu.vector_store %arg4[%c0_5, %c0_6], %5 {strides = array<i32>} : memref<64x10xf32, #tpu.memory_space<vmem>>, vector<64x10xf32>,
    return
  }
  func.func @transform_0(%arg0: i32) -> (i32, i32) {
    %c0_i32 = arith.constant 0 : i32
    %c0_i32_0 = arith.constant 0 : i32
    return %arg0, %c0_i32 : i32, i32
  }
  func.func @transform_1(%arg0: i32) -> (i32, i32) {
    %c0_i32 = arith.constant 0 : i32
    %c0_i32_0 = arith.constant 0 : i32
    %c0_i32_1 = arith.constant 0 : i32
    return %c0_i32, %c0_i32_0 : i32, i32
  }
  func.func @transform_2(%arg0: i32) -> (i32, i32) {
    %c0_i32 = arith.constant 0 : i32
    %c0_i32_0 = arith.constant 0 : i32
    %c0_i32_1 = arith.constant 0 : i32
    return %c0_i32, %c0_i32_0 : i32, i32
  }
  func.func @transform_3(%arg0: i32) -> (i32, i32) {
    %c0_i32 = arith.constant 0 : i32
    %c0_i32_0 = arith.constant 0 : i32
    return %arg0, %c0_i32 : i32, i32
  }
}

</mosaic_0001>

<llo_original>
// kernel: tpu_custom_call.1
$region0: #{tpu_custom_call.1}
  #allocation0 [shape = 'u32[]', space=smem, size = 0x4, offset = 0x4, fixed_abs, tag = 'smem constant byte address 0x4 - core index']
  #allocation1 [shape = 'u32[144,128]{1,0:T(1,128)}', space=vmem, size = 0x12000, scoped, tag = 'internal scratch']
  %s0 = inlined_call_operand.hbm [shape: f32[64,784], index: 0, kind: input, shape index: {}]
  %s1 = inlined_call_operand.hbm [shape: f32[10,784], index: 1, kind: input, shape index: {}]
  %s2 = inlined_call_operand.vmem [shape: f32[1,10], index: 2, kind: input, shape index: {}]
  %s3 = inlined_call_operand.vmem [shape: f32[64,10], index: 3, kind: output, shape index: {}]
  %s4 = sld [smem:[#allocation0]]
  $region30: #{tpu_custom_call.1} parent=0
    _
  %s6 = ssub.s32 1, %s4
  %s7 = scalar_select 0, %s6, %s4
  $region1: #{tpu_custom_call.1} parent=0
    #allocation2 [shape = 'u8[229376]{0}', space=vmem, size = 0x38000, scoped, tag = 'input window, operand 0, single buffered']
    #allocation3 [shape = 's32[1]{0}', space=sflag, size = 0x4, scoped, tag = 'scoped memory for tpu_custom_call.1']
    #allocation4 [shape = 'u8[57344]{0}', space=vmem, size = 0xe000, scoped, tag = 'input window, operand 1, single buffered']
    #allocation5 [shape = 's32[1]{0}', space=sflag, size = 0x4, scoped, tag = 'scoped memory for tpu_custom_call.1']
    %8 = vsyncpa [#allocation3], 0
    %9 = vsyncpa [#allocation5], 0
    // Predicated region
    $region2: #{tpu_custom_call.1} parent=1 // pred_check
      _
    $region3: #{tpu_custom_call.1} parent=1 // pred_check_branch
      %11 = sbr.rel (0) target = $region5
    $region4: #{tpu_custom_call.1} parent=1 // pred_region
      %s13 = ssub.s32 7168, 7168
      %14 = vsyncadd [#allocation3], %s13
      %s15 = sshll.u32 [#allocation2], 4
      %s16 = int_to_ptr.vmem [resolvable:$true] %s15
      %21 = dma.hbm_to_vmem [thread:$0]  %s0, 7168, %s16, [#allocation3], 896, 896, 56
    $region5: #{tpu_custom_call.1} parent=1 // pred_fallthru
      _
    // Predicated region
    $region6: #{tpu_custom_call.1} parent=1 // pred_check
      _
    $region7: #{tpu_custom_call.1} parent=1 // pred_check_branch
      %23 = sbr.rel (0) target = $region9
    $region8: #{tpu_custom_call.1} parent=1 // pred_region
      %s25 = ssub.s32 1792, 1792
      %26 = vsyncadd [#allocation5], %s25
      %s27 = sshll.u32 [#allocation4], 4
      %s28 = int_to_ptr.vmem [resolvable:$true] %s27
      %33 = dma.hbm_to_vmem [thread:$0]  %s1, 1792, %s28, [#allocation5], 896, 896, 56
    $region9: #{tpu_custom_call.1} parent=1 // pred_fallthru
      _
    // Predicated region
    $region10: #{tpu_custom_call.1} parent=1 // pred_check
      _
    $region11: #{tpu_custom_call.1} parent=1 // pred_check_branch
      %35 = sbr.rel (0) target = $region13
    $region12: #{tpu_custom_call.1} parent=1 // pred_region
      _
    $region13: #{tpu_custom_call.1} parent=1 // pred_fallthru
      _
    // Predicated region
    $region14: #{tpu_custom_call.1} parent=1 // pred_check
      _
    $region15: #{tpu_custom_call.1} parent=1 // pred_check_branch
      %37 = sbr.rel (0) target = $region17
    $region16: #{tpu_custom_call.1} parent=1 // pred_region
      %38 = dma.done [#allocation3], 7168
    $region17: #{tpu_custom_call.1} parent=1 // pred_fallthru
      _
    // Predicated region
    $region18: #{tpu_custom_call.1} parent=1 // pred_check
      _
    $region19: #{tpu_custom_call.1} parent=1 // pred_check_branch
      %40 = sbr.rel (0) target = $region21
    $region20: #{tpu_custom_call.1} parent=1 // pred_region
      %41 = dma.done [#allocation5], 1792
    $region21: #{tpu_custom_call.1} parent=1 // pred_fallthru
      _
    %v42 = vld [vmem:[#allocation2] sm:$0xff]
    %v43 = vld [vmem:[#allocation2 + $0x8] sm:$0xff]
    %v44 = vld [vmem:[#allocation2 + $0x10] sm:$0xff]
    %v45 = vld [vmem:[#allocation2 + $0x18] sm:$0xff]
    %v46 = vld [vmem:[#allocation2 + $0x20] sm:$0xff]
    %v47 = vld [vmem:[#allocation2 + $0x28] sm:$0xff]
    %v48 = vld [vmem:[#allocation2 + $0x30] sm:$0xff]
    %v49 = vld [vmem:[#allocation2 + $0x38] sm:$0xff]
    %v50 = vld [vmem:[#allocation2 + $0x40] sm:$0xff]
    %v51 = vld [vmem:[#allocation2 + $0x48] sm:$0xff]
    %v52 = vld [vmem:[#allocation2 + $0x50] sm:$0xff]
    %v53 = vld [vmem:[#allocation2 + $0x58] sm:$0xff]
    %v54 = vld [vmem:[#allocation2 + $0x60] sm:$0xff]
    %v55 = vld [vmem:[#allocation2 + $0x68] sm:$0xff]
    %v56 = vld [vmem:[#allocation2 + $0x70] sm:$0xff]
    %v57 = vld [vmem:[#allocation2 + $0x78] sm:$0xff]
    %v58 = vld [vmem:[#allocation2 + $0x80] sm:$0xff]
    %v59 = vld [vmem:[#allocation2 + $0x88] sm:$0xff]
    %v60 = vld [vmem:[#allocation2 + $0x90] sm:$0xff]
    %v61 = vld [vmem:[#allocation2 + $0x98] sm:$0xff]
    %v62 = vld [vmem:[#allocation2 + $0xa0] sm:$0xff]
    %v63 = vld [vmem:[#allocation2 + $0xa8] sm:$0xff]
    %v64 = vld [vmem:[#allocation2 + $0xb0] sm:$0xff]
    %v65 = vld [vmem:[#allocation2 + $0xb8] sm:$0xff]
    %v66 = vld [vmem:[#allocation2 + $0xc0] sm:$0xff]
    %v67 = vld [vmem:[#allocation2 + $0xc8] sm:$0xff]
    %v68 = vld [vmem:[#allocation2 + $0xd0] sm:$0xff]
    %v69 = vld [vmem:[#allocation2 + $0xd8] sm:$0xff]
    %v70 = vld [vmem:[#allocation2 + $0xe0] sm:$0xff]
    %v71 = vld [vmem:[#allocation2 + $0xe8] sm:$0xff]
    %v72 = vld [vmem:[#allocation2 + $0xf0] sm:$0xff]
    %v73 = vld [vmem:[#allocation2 + $0xf8] sm:$0xff]
    %v74 = vld [vmem:[#allocation2 + $0x100] sm:$0xff]
    %v75 = vld [vmem:[#allocation2 + $0x108] sm:$0xff]
    %v76 = vld [vmem:[#allocation2 + $0x110] sm:$0xff]
    %v77 = vld [vmem:[#allocation2 + $0x118] sm:$0xff]
    %v78 = vld [vmem:[#allocation2 + $0x120] sm:$0xff]
    %v79 = vld [vmem:[#allocation2 + $0x128] sm:$0xff]
    %v80 = vld [vmem:[#allocation2 + $0x130] sm:$0xff]
    %v81 = vld [vmem:[#allocation2 + $0x138] sm:$0xff]
    %v82 = vld [vmem:[#allocation2 + $0x140] sm:$0xff]
    %v83 = vld [vmem:[#allocation2 + $0x148] sm:$0xff]
    %v84 = vld [vmem:[#allocation2 + $0x150] sm:$0xff]
    %v85 = vld [vmem:[#allocation2 + $0x158] sm:$0xff]
    %v86 = vld [vmem:[#allocation2 + $0x160] sm:$0xff]
    %v87 = vld [vmem:[#allocation2 + $0x168] sm:$0xff]
    %v88 = vld [vmem:[#allocation2 + $0x170] sm:$0xff]
    %v89 = vld [vmem:[#allocation2 + $0x178] sm:$0xff]
    %v90 = vld [vmem:[#allocation2 + $0x180] sm:$0xff]
    %v91 = vld [vmem:[#allocation2 + $0x188] sm:$0xff]
    %v92 = vld [vmem:[#allocation2 + $0x190] sm:$0xff]
    %v93 = vld [vmem:[#allocation2 + $0x198] sm:$0xff]
    %v94 = vld [vmem:[#allocation2 + $0x1a0] sm:$0xff]
    %v95 = vld [vmem:[#allocation2 + $0x1a8] sm:$0xff]
    %v96 = vld [vmem:[#allocation2 + $0x1b0] sm:$0xff]
    %v97 = vld [vmem:[#allocation2 + $0x1b8] sm:$0xff]
    %v98 = vld [vmem:[#allocation4] sm:$0xff]
    %v99 = vld [vmem:[#allocation4 + $0x8] sm:$0xff]
    %v100 = vld [vmem:[#allocation4 + $0x10] sm:$0xff]
    %v101 = vld [vmem:[#allocation4 + $0x18] sm:$0xff]
    %v102 = vld [vmem:[#allocation4 + $0x20] sm:$0xff]
    %v103 = vld [vmem:[#allocation4 + $0x28] sm:$0xff]
    %v104 = vld [vmem:[#allocation4 + $0x30] sm:$0xff]
    %v105 = vld [vmem:[#allocation4 + $0x38] sm:$0x3]
    %v106 = vld [vmem:[#allocation4 + $0x40] sm:$0x3]
    %v107 = vld [vmem:[#allocation4 + $0x48] sm:$0x3]
    %v108 = vld [vmem:[#allocation4 + $0x50] sm:$0x3]
    %v109 = vld [vmem:[#allocation4 + $0x58] sm:$0x3]
    %v110 = vld [vmem:[#allocation4 + $0x60] sm:$0x3]
    %v111 = vld [vmem:[#allocation4 + $0x68] sm:$0x3]
    %v112 = vld [vmem:[%s2] sm:$0x1]
    %v114 = vlaneseq
    %v115 = vshrl.u32 %v114, 7
    %v116 = vsub.s32 0, %v115
    %v117 = vrot.slane %v112, %v116
    %vm119 = vcmask 130048
    %v121 = vsel %vm119, %v48, 0
    %v124 = vsel %vm119, %v55, 0
    %v127 = vsel %vm119, %v62, 0
    %v130 = vsel %vm119, %v69, 0
    %v133 = vsel %vm119, %v76, 0
    %v136 = vsel %vm119, %v83, 0
    %v139 = vsel %vm119, %v90, 0
    %v142 = vsel %vm119, %v97, 0
    %v145 = vsel %vm119, %v104, 0
    %v148 = vsel %vm119, %v111, 0
    %150 = vmatprep.subr.mxu0 %v99
    %151 = vmatpush1.xpose.msra.mxu0 %v98
    %152 = vmatprep.subr.mxu0 %v106
    %153 = vmatpush1.xpose.msra.mxu0 %v105
    %154 = vmatprep.subr.mxu0 0.0
    %155 = vmatpush1.xpose.msra.mxu0 0.0
    %156 = vmatprep.subr.mxu0 0.0
    %157 = vmatpush1.xpose.msra.mxu0 0.0
    %158 = vmatprep.subr.mxu0 0.0
    %159 = vmatpush1.xpose.msra.mxu0 0.0
    %160 = vmatprep.subr.mxu0 0.0
    %161 = vmatpush1.xpose.msra.mxu0 0.0
    %162 = vmatprep.subr.mxu0 0.0
    %163 = vmatpush1.xpose.msra.mxu0 0.0
    %164 = vmatprep.subr.mxu0 0.0
    %165 = vmatpush1.xpose.msra.mxu0 0.0
    %166 = vmatprep.subr.mxu0 0.0
    %167 = vmatpush1.xpose.msra.mxu0 0.0
    %168 = vmatprep.subr.mxu0 0.0
    %169 = vmatpush1.xpose.msra.mxu0 0.0
    %170 = vmatprep.subr.mxu0 0.0
    %171 = vmatpush1.xpose.msra.mxu0 0.0
    %172 = vmatprep.subr.mxu0 0.0
    %173 = vmatpush1.xpose.msra.mxu0 0.0
    %174 = vmatprep.subr.mxu0 0.0
    %175 = vmatpush1.xpose.msra.mxu0 0.0
    %176 = vmatprep.subr.mxu0 0.0
    %177 = vmatpush1.xpose.msra.mxu0 0.0
    %178 = vmatprep.subr.mxu0 0.0
    %179 = vmatpush1.xpose.msra.mxu0 0.0
    %180 = vmatprep.subr.mxu0 0.0
    %181 = vmatpush1.xpose.msra.mxu0 0.0
    %182 = vmatprep.subr.mxu0 0.0
    %183 = vmatpush1.xpose.msra.mxu0 0.0
    %184 = vmatprep.subr.mxu0 0.0
    %185 = vmatpush1.xpose.msra.mxu0 0.0
    %186 = vmatprep.subr.mxu0 0.0
    %187 = vmatpush1.xpose.msra.mxu0 0.0
    %188 = vmatprep.subr.mxu0 0.0
    %189 = vmatpush1.xpose.msra.mxu0 0.0
    %190 = vmatprep.subr.mxu0 0.0
    %191 = vmatpush1.xpose.msra.mxu0 0.0
    %192 = vmatprep.subr.mxu0 0.0
    %193 = vmatpush1.xpose.msra.mxu0 0.0
    %194 = vmatprep.subr.mxu0 0.0
    %195 = vmatpush1.xpose.msra.mxu0 0.0
    %196 = vmatprep.subr.mxu0 0.0
    %197 = vmatpush1.xpose.msra.mxu0 0.0
    %198 = vmatprep.subr.mxu0 0.0
    %199 = vmatpush1.xpose.msra.mxu0 0.0
    %200 = vmatprep.subr.mxu0 0.0
    %201 = vmatpush1.xpose.msra.mxu0 0.0
    %202 = vmatprep.subr.mxu0 0.0
    %203 = vmatpush1.xpose.msra.mxu0 0.0
    %204 = vmatprep.subr.mxu0 0.0
    %205 = vmatpush1.xpose.msra.mxu0 0.0
    %206 = vmatprep.subr.mxu0 0.0
    %207 = vmatpush1.xpose.msra.mxu0 0.0
    %208 = vmatprep.subr.mxu0 0.0
    %209 = vmatpush1.xpose.msra.mxu0 0.0
    %210 = vmatprep.subr.mxu0 0.0
    %211 = vmatpush1.xpose.msra.mxu0 0.0
    %212 = vmatprep.subr.mxu0 0.0
    %213 = vmatpush1.xpose.msra.mxu0 0.0
    %214 = vmatprep.mubr.f32.mxu0 %v43
    %215 = vmatmul.mubr.f32.gmra.mrb[0].mxu0 %v42
    %v216 = vpop.f32.mrb[0].mxu0
    %v217 = vadd.f32 %v117, %v216
    %v218 = vpop.f32.mrb[0].mxu0
    %219 = vmatprep.mubr.f32.mxu0 %v50
    %220 = vmatmul.mubr.f32.gmra.mrb[0].mxu0 %v49
    %v221 = vpop.f32.mrb[0].mxu0
    %v222 = vadd.f32 %v117, %v221
    %v223 = vpop.f32.mrb[0].mxu0
    %224 = vmatprep.mubr.f32.mxu0 %v57
    %225 = vmatmul.mubr.f32.gmra.mrb[0].mxu0 %v56
    %v226 = vpop.f32.mrb[0].mxu0
    %v227 = vadd.f32 %v117, %v226
    %v228 = vpop.f32.mrb[0].mxu0
    %229 = vmatprep.mubr.f32.mxu0 %v64
    %230 = vmatmul.mubr.f32.gmra.mrb[0].mxu0 %v63
    %v231 = vpop.f32.mrb[0].mxu0
    %v232 = vadd.f32 %v117, %v231
    %v233 = vpop.f32.mrb[0].mxu0
    %234 = vmatprep.mubr.f32.mxu0 %v71
    %235 = vmatmul.mubr.f32.gmra.mrb[0].mxu0 %v70
    %v236 = vpop.f32.mrb[0].mxu0
    %v237 = vadd.f32 %v117, %v236
    %v238 = vpop.f32.mrb[0].mxu0
    %239 = vmatprep.mubr.f32.mxu0 %v78
    %240 = vmatmul.mubr.f32.gmra.mrb[0].mxu0 %v77
    %v241 = vpop.f32.mrb[0].mxu0
    %v242 = vadd.f32 %v117, %v241
    %v243 = vpop.f32.mrb[0].mxu0
    %244 = vmatprep.mubr.f32.mxu0 %v85
    %245 = vmatmul.mubr.f32.gmra.mrb[0].mxu0 %v84
    %v246 = vpop.f32.mrb[0].mxu0
    %v247 = vadd.f32 %v117, %v246
    %v248 = vpop.f32.mrb[0].mxu0
    %249 = vmatprep.mubr.f32.mxu0 %v92
    %250 = vmatmul.mubr.f32.gmra.mrb[0].mxu0 %v91
    %v251 = vpop.f32.mrb[0].mxu0
    %v252 = vadd.f32 %v117, %v251
    %v253 = vpop.f32.mrb[0].mxu0
    %254 = vdwg.mxu0
    %255 = vmatprep.subr.mxu0 %v101
    %256 = vmatpush1.xpose.msra.mxu0 %v100
    %257 = vmatprep.subr.mxu0 %v108
    %258 = vmatpush1.xpose.msra.mxu0 %v107
    %259 = vmatprep.subr.mxu0 0.0
    %260 = vmatpush1.xpose.msra.mxu0 0.0
    %261 = vmatprep.subr.mxu0 0.0
    %262 = vmatpush1.xpose.msra.mxu0 0.0
    %263 = vmatprep.subr.mxu0 0.0
    %264 = vmatpush1.xpose.msra.mxu0 0.0
    %265 = vmatprep.subr.mxu0 0.0
    %266 = vmatpush1.xpose.msra.mxu0 0.0
    %267 = vmatprep.subr.mxu0 0.0
    %268 = vmatpush1.xpose.msra.mxu0 0.0
    %269 = vmatprep.subr.mxu0 0.0
    %270 = vmatpush1.xpose.msra.mxu0 0.0
    %271 = vmatprep.subr.mxu0 0.0
    %272 = vmatpush1.xpose.msra.mxu0 0.0
    %273 = vmatprep.subr.mxu0 0.0
    %274 = vmatpush1.xpose.msra.mxu0 0.0
    %275 = vmatprep.subr.mxu0 0.0
    %276 = vmatpush1.xpose.msra.mxu0 0.0
    %277 = vmatprep.subr.mxu0 0.0
    %278 = vmatpush1.xpose.msra.mxu0 0.0
    %279 = vmatprep.subr.mxu0 0.0
    %280 = vmatpush1.xpose.msra.mxu0 0.0
    %281 = vmatprep.subr.mxu0 0.0
    %282 = vmatpush1.xpose.msra.mxu0 0.0
    %283 = vmatprep.subr.mxu0 0.0
    %284 = vmatpush1.xpose.msra.mxu0 0.0
    %285 = vmatprep.subr.mxu0 0.0
    %286 = vmatpush1.xpose.msra.mxu0 0.0
    %287 = vmatprep.subr.mxu0 0.0
    %288 = vmatpush1.xpose.msra.mxu0 0.0
    %289 = vmatprep.subr.mxu0 0.0
    %290 = vmatpush1.xpose.msra.mxu0 0.0
    %291 = vmatprep.subr.mxu0 0.0
    %292 = vmatpush1.xpose.msra.mxu0 0.0
    %293 = vmatprep.subr.mxu0 0.0
    %294 = vmatpush1.xpose.msra.mxu0 0.0
    %295 = vmatprep.subr.mxu0 0.0
    %296 = vmatpush1.xpose.msra.mxu0 0.0
    %297 = vmatprep.subr.mxu0 0.0
    %298 = vmatpush1.xpose.msra.mxu0 0.0
    %299 = vmatprep.subr.mxu0 0.0
    %300 = vmatpush1.xpose.msra.mxu0 0.0
    %301 = vmatprep.subr.mxu0 0.0
    %302 = vmatpush1.xpose.msra.mxu0 0.0
    %303 = vmatprep.subr.mxu0 0.0
    %304 = vmatpush1.xpose.msra.mxu0 0.0
    %305 = vmatprep.subr.mxu0 0.0
    %306 = vmatpush1.xpose.msra.mxu0 0.0
    %307 = vmatprep.subr.mxu0 0.0
    %308 = vmatpush1.xpose.msra.mxu0 0.0
    %309 = vmatprep.subr.mxu0 0.0
    %310 = vmatpush1.xpose.msra.mxu0 0.0
    %311 = vmatprep.subr.mxu0 0.0
    %312 = vmatpush1.xpose.msra.mxu0 0.0
    %313 = vmatprep.subr.mxu0 0.0
    %314 = vmatpush1.xpose.msra.mxu0 0.0
    %315 = vmatprep.subr.mxu0 0.0
    %316 = vmatpush1.xpose.msra.mxu0 0.0
    %317 = vmatprep.subr.mxu0 0.0
    %318 = vmatpush1.xpose.msra.mxu0 0.0
    %319 = vmatprep.mubr.f32.mxu0 %v45
    %320 = vmatmul.mubr.f32.gmra.mrb[0].mxu0 %v44
    %v321 = vpop.f32.mrb[0].mxu0
    %v322 = vadd.f32 %v217, %v321
    %v323 = vpop.f32.mrb[0].mxu0
    %324 = vmatprep.mubr.f32.mxu0 %v52
    %325 = vmatmul.mubr.f32.gmra.mrb[0].mxu0 %v51
    %v326 = vpop.f32.mrb[0].mxu0
    %v327 = vadd.f32 %v222, %v326
    %v328 = vpop.f32.mrb[0].mxu0
    %329 = vmatprep.mubr.f32.mxu0 %v59
    %330 = vmatmul.mubr.f32.gmra.mrb[0].mxu0 %v58
    %v331 = vpop.f32.mrb[0].mxu0
    %v332 = vadd.f32 %v227, %v331
    %v333 = vpop.f32.mrb[0].mxu0
    %334 = vmatprep.mubr.f32.mxu0 %v66
    %335 = vmatmul.mubr.f32.gmra.mrb[0].mxu0 %v65
    %v336 = vpop.f32.mrb[0].mxu0
    %v337 = vadd.f32 %v232, %v336
    %v338 = vpop.f32.mrb[0].mxu0
    %339 = vmatprep.mubr.f32.mxu0 %v73
    %340 = vmatmul.mubr.f32.gmra.mrb[0].mxu0 %v72
    %v341 = vpop.f32.mrb[0].mxu0
    %v342 = vadd.f32 %v237, %v341
    %v343 = vpop.f32.mrb[0].mxu0
    %344 = vmatprep.mubr.f32.mxu0 %v80
    %345 = vmatmul.mubr.f32.gmra.mrb[0].mxu0 %v79
    %v346 = vpop.f32.mrb[0].mxu0
    %v347 = vadd.f32 %v242, %v346
    %v348 = vpop.f32.mrb[0].mxu0
    %349 = vmatprep.mubr.f32.mxu0 %v87
    %350 = vmatmul.mubr.f32.gmra.mrb[0].mxu0 %v86
    %v351 = vpop.f32.mrb[0].mxu0
    %v352 = vadd.f32 %v247, %v351
    %v353 = vpop.f32.mrb[0].mxu0
    %354 = vmatprep.mubr.f32.mxu0 %v94
    %355 = vmatmul.mubr.f32.gmra.mrb[0].mxu0 %v93
    %v356 = vpop.f32.mrb[0].mxu0
    %v357 = vadd.f32 %v252, %v356
    %v358 = vpop.f32.mrb[0].mxu0
    %359 = vdwg.mxu0
    %360 = vmatprep.subr.mxu0 %v103
    %361 = vmatpush1.xpose.msra.mxu0 %v102
    %362 = vmatprep.subr.mxu0 %v110
    %363 = vmatpush1.xpose.msra.mxu0 %v109
    %364 = vmatprep.subr.mxu0 0.0
    %365 = vmatpush1.xpose.msra.mxu0 0.0
    %366 = vmatprep.subr.mxu0 0.0
    %367 = vmatpush1.xpose.msra.mxu0 0.0
    %368 = vmatprep.subr.mxu0 0.0
    %369 = vmatpush1.xpose.msra.mxu0 0.0
    %370 = vmatprep.subr.mxu0 0.0
    %371 = vmatpush1.xpose.msra.mxu0 0.0
    %372 = vmatprep.subr.mxu0 0.0
    %373 = vmatpush1.xpose.msra.mxu0 0.0
    %374 = vmatprep.subr.mxu0 0.0
    %375 = vmatpush1.xpose.msra.mxu0 0.0
    %376 = vmatprep.subr.mxu0 0.0
    %377 = vmatpush1.xpose.msra.mxu0 0.0
    %378 = vmatprep.subr.mxu0 0.0
    %379 = vmatpush1.xpose.msra.mxu0 0.0
    %380 = vmatprep.subr.mxu0 0.0
    %381 = vmatpush1.xpose.msra.mxu0 0.0
    %382 = vmatprep.subr.mxu0 0.0
    %383 = vmatpush1.xpose.msra.mxu0 0.0
    %384 = vmatprep.subr.mxu0 0.0
    %385 = vmatpush1.xpose.msra.mxu0 0.0
    %386 = vmatprep.subr.mxu0 0.0
    %387 = vmatpush1.xpose.msra.mxu0 0.0
    %388 = vmatprep.subr.mxu0 0.0
    %389 = vmatpush1.xpose.msra.mxu0 0.0
    %390 = vmatprep.subr.mxu0 0.0
    %391 = vmatpush1.xpose.msra.mxu0 0.0
    %392 = vmatprep.subr.mxu0 0.0
    %393 = vmatpush1.xpose.msra.mxu0 0.0
    %394 = vmatprep.subr.mxu0 0.0
    %395 = vmatpush1.xpose.msra.mxu0 0.0
    %396 = vmatprep.subr.mxu0 0.0
    %397 = vmatpush1.xpose.msra.mxu0 0.0
    %398 = vmatprep.subr.mxu0 0.0
    %399 = vmatpush1.xpose.msra.mxu0 0.0
    %400 = vmatprep.subr.mxu0 0.0
    %401 = vmatpush1.xpose.msra.mxu0 0.0
    %402 = vmatprep.subr.mxu0 0.0
    %403 = vmatpush1.xpose.msra.mxu0 0.0
    %404 = vmatprep.subr.mxu0 0.0
    %405 = vmatpush1.xpose.msra.mxu0 0.0
    %406 = vmatprep.subr.mxu0 0.0
    %407 = vmatpush1.xpose.msra.mxu0 0.0
    %408 = vmatprep.subr.mxu0 0.0
    %409 = vmatpush1.xpose.msra.mxu0 0.0
    %410 = vmatprep.subr.mxu0 0.0
    %411 = vmatpush1.xpose.msra.mxu0 0.0
    %412 = vmatprep.subr.mxu0 0.0
    %413 = vmatpush1.xpose.msra.mxu0 0.0
    %414 = vmatprep.subr.mxu0 0.0
    %415 = vmatpush1.xpose.msra.mxu0 0.0
    %416 = vmatprep.subr.mxu0 0.0
    %417 = vmatpush1.xpose.msra.mxu0 0.0
    %418 = vmatprep.subr.mxu0 0.0
    %419 = vmatpush1.xpose.msra.mxu0 0.0
    %420 = vmatprep.subr.mxu0 0.0
    %421 = vmatpush1.xpose.msra.mxu0 0.0
    %422 = vmatprep.subr.mxu0 0.0
    %423 = vmatpush1.xpose.msra.mxu0 0.0
    %424 = vmatprep.mubr.f32.mxu0 %v47
    %425 = vmatmul.mubr.f32.gmra.mrb[0].mxu0 %v46
    %v426 = vpop.f32.mrb[0].mxu0
    %v427 = vadd.f32 %v322, %v426
    %v428 = vpop.f32.mrb[0].mxu0
    %429 = vmatprep.mubr.f32.mxu0 %v54
    %430 = vmatmul.mubr.f32.gmra.mrb[0].mxu0 %v53
    %v431 = vpop.f32.mrb[0].mxu0
    %v432 = vadd.f32 %v327, %v431
    %v433 = vpop.f32.mrb[0].mxu0
    %434 = vmatprep.mubr.f32.mxu0 %v61
    %435 = vmatmul.mubr.f32.gmra.mrb[0].mxu0 %v60
    %v436 = vpop.f32.mrb[0].mxu0
    %v437 = vadd.f32 %v332, %v436
    %v438 = vpop.f32.mrb[0].mxu0
    %439 = vmatprep.mubr.f32.mxu0 %v68
    %440 = vmatmul.mubr.f32.gmra.mrb[0].mxu0 %v67
    %v441 = vpop.f32.mrb[0].mxu0
    %v442 = vadd.f32 %v337, %v441
    %v443 = vpop.f32.mrb[0].mxu0
    %444 = vmatprep.mubr.f32.mxu0 %v75
    %445 = vmatmul.mubr.f32.gmra.mrb[0].mxu0 %v74
    %v446 = vpop.f32.mrb[0].mxu0
    %v447 = vadd.f32 %v342, %v446
    %v448 = vpop.f32.mrb[0].mxu0
    %449 = vmatprep.mubr.f32.mxu0 %v82
    %450 = vmatmul.mubr.f32.gmra.mrb[0].mxu0 %v81
    %v451 = vpop.f32.mrb[0].mxu0
    %v452 = vadd.f32 %v347, %v451
    %v453 = vpop.f32.mrb[0].mxu0
    %454 = vmatprep.mubr.f32.mxu0 %v89
    %455 = vmatmul.mubr.f32.gmra.mrb[0].mxu0 %v88
    %v456 = vpop.f32.mrb[0].mxu0
    %v457 = vadd.f32 %v352, %v456
    %v458 = vpop.f32.mrb[0].mxu0
    %459 = vmatprep.mubr.f32.mxu0 %v96
    %460 = vmatmul.mubr.f32.gmra.mrb[0].mxu0 %v95
    %v461 = vpop.f32.mrb[0].mxu0
    %v462 = vadd.f32 %v357, %v461
    %v463 = vpop.f32.mrb[0].mxu0
    %464 = vdwg.mxu0
    %465 = vmatprep.subr.mxu0 0.0
    %466 = vmatpush1.xpose.msra.mxu0 %v145
    %467 = vmatprep.subr.mxu0 0.0
    %468 = vmatpush1.xpose.msra.mxu0 %v148
    %469 = vmatprep.subr.mxu0 0.0
    %470 = vmatpush1.xpose.msra.mxu0 0.0
    %471 = vmatprep.subr.mxu0 0.0
    %472 = vmatpush1.xpose.msra.mxu0 0.0
    %473 = vmatprep.subr.mxu0 0.0
    %474 = vmatpush1.xpose.msra.mxu0 0.0
    %475 = vmatprep.subr.mxu0 0.0
    %476 = vmatpush1.xpose.msra.mxu0 0.0
    %477 = vmatprep.subr.mxu0 0.0
    %478 = vmatpush1.xpose.msra.mxu0 0.0
    %479 = vmatprep.subr.mxu0 0.0
    %480 = vmatpush1.xpose.msra.mxu0 0.0
    %481 = vmatprep.subr.mxu0 0.0
    %482 = vmatpush1.xpose.msra.mxu0 0.0
    %483 = vmatprep.subr.mxu0 0.0
    %484 = vmatpush1.xpose.msra.mxu0 0.0
    %485 = vmatprep.subr.mxu0 0.0
    %486 = vmatpush1.xpose.msra.mxu0 0.0
    %487 = vmatprep.subr.mxu0 0.0
    %488 = vmatpush1.xpose.msra.mxu0 0.0
    %489 = vmatprep.subr.mxu0 0.0
    %490 = vmatpush1.xpose.msra.mxu0 0.0
    %491 = vmatprep.subr.mxu0 0.0
    %492 = vmatpush1.xpose.msra.mxu0 0.0
    %493 = vmatprep.subr.mxu0 0.0
    %494 = vmatpush1.xpose.msra.mxu0 0.0
    %495 = vmatprep.subr.mxu0 0.0
    %496 = vmatpush1.xpose.msra.mxu0 0.0
    %497 = vmatprep.subr.mxu0 0.0
    %498 = vmatpush1.xpose.msra.mxu0 0.0
    %499 = vmatprep.subr.mxu0 0.0
    %500 = vmatpush1.xpose.msra.mxu0 0.0
    %501 = vmatprep.subr.mxu0 0.0
    %502 = vmatpush1.xpose.msra.mxu0 0.0
    %503 = vmatprep.subr.mxu0 0.0
    %504 = vmatpush1.xpose.msra.mxu0 0.0
    %505 = vmatprep.subr.mxu0 0.0
    %506 = vmatpush1.xpose.msra.mxu0 0.0
    %507 = vmatprep.subr.mxu0 0.0
    %508 = vmatpush1.xpose.msra.mxu0 0.0
    %509 = vmatprep.subr.mxu0 0.0
    %510 = vmatpush1.xpose.msra.mxu0 0.0
    %511 = vmatprep.subr.mxu0 0.0
    %512 = vmatpush1.xpose.msra.mxu0 0.0
    %513 = vmatprep.subr.mxu0 0.0
    %514 = vmatpush1.xpose.msra.mxu0 0.0
    %515 = vmatprep.subr.mxu0 0.0
    %516 = vmatpush1.xpose.msra.mxu0 0.0
    %517 = vmatprep.subr.mxu0 0.0
    %518 = vmatpush1.xpose.msra.mxu0 0.0
    %519 = vmatprep.subr.mxu0 0.0
    %520 = vmatpush1.xpose.msra.mxu0 0.0
    %521 = vmatprep.subr.mxu0 0.0
    %522 = vmatpush1.xpose.msra.mxu0 0.0
    %523 = vmatprep.subr.mxu0 0.0
    %524 = vmatpush1.xpose.msra.mxu0 0.0
    %525 = vmatprep.subr.mxu0 0.0
    %526 = vmatpush1.xpose.msra.mxu0 0.0
    %527 = vmatprep.subr.mxu0 0.0
    %528 = vmatpush1.xpose.msra.mxu0 0.0
    %529 = vmatprep.mubr.f32.mxu0 0.0
    %530 = vmatmul.mubr.f32.gmra.mrb[0].mxu0 %v121
    %v531 = vpop.f32.mrb[0].mxu0
    %v532 = vadd.f32 %v427, %v531
    %v533 = vpop.f32.mrb[0].mxu0
    %534 = vmatprep.mubr.f32.mxu0 0.0
    %535 = vmatmul.mubr.f32.gmra.mrb[0].mxu0 %v124
    %v536 = vpop.f32.mrb[0].mxu0
    %v537 = vadd.f32 %v432, %v536
    %v538 = vpop.f32.mrb[0].mxu0
    %539 = vmatprep.mubr.f32.mxu0 0.0
    %540 = vmatmul.mubr.f32.gmra.mrb[0].mxu0 %v127
    %v541 = vpop.f32.mrb[0].mxu0
    %v542 = vadd.f32 %v437, %v541
    %v543 = vpop.f32.mrb[0].mxu0
    %544 = vmatprep.mubr.f32.mxu0 0.0
    %545 = vmatmul.mubr.f32.gmra.mrb[0].mxu0 %v130
    %v546 = vpop.f32.mrb[0].mxu0
    %v547 = vadd.f32 %v442, %v546
    %v548 = vpop.f32.mrb[0].mxu0
    %549 = vmatprep.mubr.f32.mxu0 0.0
    %550 = vmatmul.mubr.f32.gmra.mrb[0].mxu0 %v133
    %v551 = vpop.f32.mrb[0].mxu0
    %v552 = vadd.f32 %v447, %v551
    %v553 = vpop.f32.mrb[0].mxu0
    %554 = vmatprep.mubr.f32.mxu0 0.0
    %555 = vmatmul.mubr.f32.gmra.mrb[0].mxu0 %v136
    %v556 = vpop.f32.mrb[0].mxu0
    %v557 = vadd.f32 %v452, %v556
    %v558 = vpop.f32.mrb[0].mxu0
    %559 = vmatprep.mubr.f32.mxu0 0.0
    %560 = vmatmul.mubr.f32.gmra.mrb[0].mxu0 %v139
    %v561 = vpop.f32.mrb[0].mxu0
    %v562 = vadd.f32 %v457, %v561
    %v563 = vpop.f32.mrb[0].mxu0
    %564 = vmatprep.mubr.f32.mxu0 0.0
    %565 = vmatmul.mubr.f32.gmra.mrb[0].mxu0 %v142
    %v566 = vpop.f32.mrb[0].mxu0
    %v567 = vadd.f32 %v462, %v566
    %v568 = vpop.f32.mrb[0].mxu0
    %569 = vdwg.mxu0
    %vm570 = vcmask 80896
    %571 = vst.msk [vmem:[%s3] sm:$0xff] %vm570, %v532
    %572 = vst.msk [vmem:[%s3 + $0x8] sm:$0xff] %vm570, %v537
    %573 = vst.msk [vmem:[%s3 + $0x10] sm:$0xff] %vm570, %v542
    %574 = vst.msk [vmem:[%s3 + $0x18] sm:$0xff] %vm570, %v547
    %575 = vst.msk [vmem:[%s3 + $0x20] sm:$0xff] %vm570, %v552
    %576 = vst.msk [vmem:[%s3 + $0x28] sm:$0xff] %vm570, %v557
    %577 = vst.msk [vmem:[%s3 + $0x30] sm:$0xff] %vm570, %v562
    %578 = vst.msk [vmem:[%s3 + $0x38] sm:$0xff] %vm570, %v567
    // Predicated region
    $region22: #{tpu_custom_call.1} parent=1 // pred_check
      _
    $region23: #{tpu_custom_call.1} parent=1 // pred_check_branch
      %580 = sbr.rel (0) target = $region25
    $region24: #{tpu_custom_call.1} parent=1 // pred_region
      _
    $region25: #{tpu_custom_call.1} parent=1 // pred_fallthru
      _
    // Predicated region
    $region26: #{tpu_custom_call.1} parent=1 // pred_check
      _
    $region27: #{tpu_custom_call.1} parent=1 // pred_check_branch
      %582 = sbr.rel (0) target = $region29
    $region28: #{tpu_custom_call.1} parent=1 // pred_region
      _
    $region29: #{tpu_custom_call.1} parent=1 // pred_fallthru
      _
    %583 = vsyncpa [#allocation3], 1
    %584 = vsyncpa [#allocation5], 1

</llo_original>
